<compile_context>
chip_gen: v7x
topology: tpu7x:2x2x1
jax: 0.10.0
libtpu: 0.0.40
codegen_flags: <defaults>
</compile_context>

<pallas_src>
import functools
import math

import jax
import jax.numpy as jnp
from jax.experimental import pallas as pl
from jax.experimental.pallas import tpu as pltpu


def _cdiv(a: int, b: int) -> int:
    return -(-a // b)


def _usable_vmem_bytes() -> int:
    """Usable VMEM budget with headroom; v7x-safe fallback if query fails."""
    try:
        cap = int(pltpu.get_tpu_info().vmem_capacity_bytes)
    except Exception:
        cap = 64 * 1024 * 1024  # conservative (v7x per-core VMEM)
    return max(cap * 3 // 4, cap - 32 * 1024 * 1024)


def _spatial_fc_kernel(x_ref, w_ref, b_ref, o_ref):
    # x_ref: (gpb, R, D)  gpb groups of G batch elements, R = G*N rows each
    # w_ref: (R, R)       block-diagonal kron(I_G, W), resident across grid
    # b_ref: (R, 1)       bias tiled G times (f32), resident
    # o_ref: (gpb, R, D)
    gpb, rows, d = x_ref.shape
    w = w_ref[...]

    # Hoisted once per grid step (JAX does not CSE broadcast_in_dim).
    bias_slab = jnp.broadcast_to(b_ref[...], (rows, d)).astype(jnp.float32)

    def body(g, carry):
        xg = x_ref[g]                                             # (R, D)
        y = jnp.dot(w, xg, preferred_element_type=jnp.float32)    # MXU, f32 acc
        o_ref[g] = (y + bias_slab).astype(o_ref.dtype)
        return carry

    # Short loops: fully unroll (scheduler visibility); long: modest unroll
    # keeps code size bounded while pipelining vld / MXU / vst.
    unroll = gpb if gpb <= 8 else 4
    jax.lax.fori_loop(0, gpb, body, 0, unroll=unroll)


@functools.partial(jax.jit, static_argnames=("target_tile_bytes",))
def spatial_fc(x, weight, bias, *, target_tile_bytes=8 * 1024 * 1024):
    """out[b] = weight @ x[b] + bias[:, None].

    x: (B, N, D) float32 or bfloat16, weight: (N, N), bias: (N,)
    Returns (B, N, D) in x.dtype.  Matches PyTorch transpose->Linear(n,n)->transpose.
    """
    B, N, D = x.shape
    assert weight.shape == (N, N) and bias.shape == (N,)
    itemsize = jnp.dtype(x.dtype).itemsize

    # ---- batch-group size G (batch elements fused into one MXU dot) --------
    # Target ~128 rows of contraction for f32, ~256 for 16-bit inputs; keeps
    # the (wasted) block-diagonal MXU work safely under the memory roofline.
    target_rows = 256 if itemsize < 4 else 128
    G = max(1, min(target_rows // max(N, 1), B))
    R = G * N                                    # rows per group / per dot

    # Block-diagonal weight kron(I_G, W) and per-row bias (bias[i] at row b*N+i).
    # Matmul operands match x.dtype (bf16 x -> bf16 W on the MXU); bias stays f32.
    w_bd = jnp.kron(jnp.eye(G, dtype=weight.dtype), weight).astype(x.dtype)   # (R, R)
    bias_col = jnp.tile(bias.astype(jnp.float32), G).reshape(R, 1)            # (R, 1)

    # ---- VMEM budget / tile sizing -----------------------------------------
    usable = _usable_vmem_bytes()
    w_bytes = R * R * itemsize
    reserved = (2 * w_bytes            # resident weight (double-buffer charge)
                + 2 * R * 4            # bias
                + 2 * R * D * 4        # f32 matmul result + bias slab temps
                + 4 * 1024 * 1024)     # headroom
    tile_target = max(R * D * itemsize,
                      min(target_tile_bytes, (usable - reserved) // 4))

    group_bytes = R * D * itemsize
    n_groups = _cdiv(B, G)
    gpb = max(1, min(tile_target // group_bytes, n_groups))   # groups per block
    grid_n = _cdiv(n_groups, gpb)

    # Prefer >= 4 grid steps (>= 2 per TC on 2-TC parts) when the batch is big
    # enough that tiles stay >= 512 KiB; on 1-TC parts the extra steps are noise.
    min_split_bytes = 512 * 1024
    for want_steps in (4, 2):
        if grid_n >= want_steps:
            break
        cand_gpb = _cdiv(n_groups, want_steps)
        if n_groups >= want_steps and cand_gpb * group_bytes >= min_split_bytes:
            gpb = cand_gpb
            grid_n = _cdiv(n_groups, gpb)
            break

    # Pad awkward batch sizes up to a full grid (padded rows sliced off below)
    # instead of degrading to 1-element tiles.
    B_pad = grid_n * gpb * G
    xp = x if B_pad == B else jnp.pad(x, ((0, B_pad - B), (0, 0), (0, 0)))
    x3 = xp.reshape(grid_n * gpb, R, D)          # free row-major reshape

    block_bytes = gpb * group_bytes
    footprint = 4 * block_bytes + reserved       # dbl-buffered in + out tiles
    vmem_limit = int(max(footprint, 16 * 1024 * 1024))

    cost = pl.CostEstimate(
        flops=2 * B * N * N * D,
        bytes_accessed=2 * B * N * D * itemsize + w_bytes + R * 4,
        transcendentals=0,
    )

    out3 = pl.pallas_call(
        _spatial_fc_kernel,
        out_shape=jax.ShapeDtypeStruct((grid_n * gpb, R, D), x.dtype),
        grid_spec=pltpu.PrefetchScalarGridSpec(
            num_scalar_prefetch=0,
            grid=(grid_n,),
            in_specs=[
                pl.BlockSpec((gpb, R, D), lambda t: (t, 0, 0)),   # x groups tile
                pl.BlockSpec((R, R), lambda t: (0, 0)),           # weight (resident)
                pl.BlockSpec((R, 1), lambda t: (0, 0)),           # bias   (resident)
            ],
            out_specs=pl.BlockSpec((gpb, R, D), lambda t: (t, 0, 0)),
        ),
        compiler_params=pltpu.CompilerParams(
            dimension_semantics=("parallel",),
            vmem_limit_bytes=vmem_limit,
        ),
        cost_estimate=cost,
    )(x3, w_bd, bias_col)

    out = out3.reshape(B_pad, N, D)
    if B_pad != B:
        out = out[:B]
    return out


if __name__ == "__main__":
    # Small shapes consistent with the module: x is (batch, n, d), Linear dim = n.
    B, N, D = 8, 8, 128
    key = jax.random.PRNGKey(0)
    kx, kw, kb = jax.random.split(key, 3)

    x = jax.random.normal(kx, (B, N, D), dtype=jnp.float32)
    # nn.Linear(dim, dim): weight (N, N), bias (N,), uniform(-1/sqrt(N), 1/sqrt(N))
    bound = 1.0 / jnp.sqrt(jnp.float32(N))
    weight = jax.random.uniform(kw, (N, N), jnp.float32, -bound, bound)
    bias = jax.random.uniform(kb, (N,), jnp.float32, -bound, bound)

    def reference(x_, w_, b_):
        xt = jnp.transpose(x_, (0, 2, 1))               # (B, D, N)
        y = jnp.einsum('bdn,mn->bdm', xt, w_) + b_      # Linear over n
        return jnp.transpose(y, (0, 2, 1))              # (B, N, D)

    # f32 path (tight tolerance).
    out = jax.block_until_ready(spatial_fc(x, weight, bias))
    ref = reference(x, weight, bias)
    assert out.shape == (B, N, D)
    assert jnp.allclose(out, ref, atol=1e-5, rtol=1e-5), "f32 mismatch vs reference"

    # bf16 I/O path (halves HBM traffic; accumulation + bias add stay f32).
    x16 = x.astype(jnp.bfloat16)
    w16 = weight.astype(jnp.bfloat16)
    out16 = jax.block_until_ready(spatial_fc(x16, w16, bias))
    ref16 = reference(x16.astype(jnp.float32), w16.astype(jnp.float32), bias)
    assert out16.dtype == jnp.bfloat16
    assert jnp.allclose(out16.astype(jnp.float32), ref16, atol=5e-2, rtol=5e-2), \
        "bf16 mismatch vs reference"

    # Awkward batch size (exercises the padded-batch path).
    xb = jax.random.normal(kx, (19, N, D), dtype=jnp.float32)
    outb = jax.block_until_ready(spatial_fc(xb, weight, bias))
    assert jnp.allclose(outb, reference(xb, weight, bias), atol=1e-5, rtol=1e-5), \
        "padded-batch mismatch vs reference"

    print("KERNEL_OK")
</pallas_src>

<mosaic_0001>
module attributes {stable_mosaic.version = 11 : i64} {
  func.func @_spatial_fc_kernel(%arg0: i32, %arg1: memref<1x64x128xf32, #tpu.memory_space<vmem>>, %arg2: memref<64x64xf32, #tpu.memory_space<vmem>>, %arg3: memref<64x1xf32, #tpu.memory_space<vmem>>, %arg4: memref<1x64x128xf32, #tpu.memory_space<vmem>>) attributes {dimension_semantics = [#tpu.dimension_semantics<parallel>], iteration_bounds = array<i64: 1>, scalar_prefetch = 0 : i64, scratch_operands = 0 : i64, tpu.core_type = #tpu.core_type<tc>, window_params = [{transform_indices = @transform_0, window_bounds = array<i64: 1, 64, 128>}, {pipeline_mode = #tpu.pipeline_mode<synchronous>, transform_indices = @transform_1, window_bounds = array<i64: 64, 64>}, {pipeline_mode = #tpu.pipeline_mode<synchronous>, transform_indices = @transform_2, window_bounds = array<i64: 64, 1>}, {transform_indices = @transform_3, window_bounds = array<i64: 1, 64, 128>}]} {
    %c0 = arith.constant 0 : index
    %c0_0 = arith.constant 0 : index
    %0 = vector.load %arg2[%c0, %c0_0] : memref<64x64xf32, #tpu.memory_space<vmem>>, vector<64x64xf32>
    %c0_1 = arith.constant 0 : index
    %c0_2 = arith.constant 0 : index
    %1 = vector.load %arg3[%c0_1, %c0_2] : memref<64x1xf32, #tpu.memory_space<vmem>>, vector<64x1xf32>
    %2 = vector.shape_cast %1 : vector<64x1xf32> to vector<64x1xf32>
    %3 = vector.broadcast %2 : vector<64x1xf32> to vector<64x128xf32>
    %c0_i32 = arith.constant 0 : i32
    %4 = arith.index_cast %c0_i32 : i32 to index
    %c0_3 = arith.constant 0 : index
    %c0_4 = arith.constant 0 : index
    %5 = vector.load %arg1[%4, %c0_3, %c0_4] : memref<1x64x128xf32, #tpu.memory_space<vmem>>, vector<1x64x128xf32>
    %6 = vector.shape_cast %5 : vector<1x64x128xf32> to vector<64x128xf32>
    %cst = arith.constant dense<0.000000e+00> : vector<64x128xf32>
    %7 = tpu.matmul %0, %6, %cst {dimension_numbers = #tpu.dot_dimension_numbers<[1], [0], [0], [1], [0, 0, 1, 1], [], []>} : vector<64x64xf32>, vector<64x128xf32>, vector<64x128xf32> -> vector<64x128xf32>
    %8 = arith.addf %7, %3 : vector<64x128xf32>
    %9 = arith.index_cast %c0_i32 : i32 to index
    %c0_5 = arith.constant 0 : index
    %c0_6 = arith.constant 0 : index
    %10 = vector.load %arg4[%9, %c0_5, %c0_6] : memref<1x64x128xf32, #tpu.memory_space<vmem>>, vector<1x64x128xf32>
    %11 = vector.shape_cast %10 : vector<1x64x128xf32> to vector<64x128xf32>
    %12 = vector.shape_cast %8 : vector<64x128xf32> to vector<1x64x128xf32>
    tpu.vector_store %arg4[%9, %c0_5, %c0_6], %12 {strides = array<i32>} : memref<1x64x128xf32, #tpu.memory_space<vmem>>, vector<1x64x128xf32>,
    %c1_i32 = arith.constant 1 : i32
    return
  }
  func.func @transform_0(%arg0: i32) -> (i32, i32, i32) {
    %c0_i32 = arith.constant 0 : i32
    %c0_i32_0 = arith.constant 0 : i32
    %c0_i32_1 = arith.constant 0 : i32
    return %arg0, %c0_i32, %c0_i32_0 : i32, i32, i32
  }
  func.func @transform_1(%arg0: i32) -> (i32, i32) {
    %c0_i32 = arith.constant 0 : i32
    %c0_i32_0 = arith.constant 0 : i32
    %c0_i32_1 = arith.constant 0 : i32
    return %c0_i32, %c0_i32_0 : i32, i32
  }
  func.func @transform_2(%arg0: i32) -> (i32, i32) {
    %c0_i32 = arith.constant 0 : i32
    %c0_i32_0 = arith.constant 0 : i32
    %c0_i32_1 = arith.constant 0 : i32
    return %c0_i32, %c0_i32_0 : i32, i32
  }
  func.func @transform_3(%arg0: i32) -> (i32, i32, i32) {
    %c0_i32 = arith.constant 0 : i32
    %c0_i32_0 = arith.constant 0 : i32
    %c0_i32_1 = arith.constant 0 : i32
    return %arg0, %c0_i32, %c0_i32_0 : i32, i32, i32
  }
}

</mosaic_0001>

<llo_original>
// kernel: tile.8
$region0: #{tile.8}
  #allocation0 [shape = 's32[1]{0}', space=sflag, size = 0x4, scoped, tag = 'scoped memory for tile.8']
  %s0 = inlined_call_operand.vmem [shape: f32[8], index: 0, kind: input, shape index: {}]
  %s1 = inlined_call_operand.vmem [shape: f32[8,8], index: 1, kind: output, shape index: {}]
  // Predicated region
  $region2: #{tile.8} parent=0 // pred_check
    _
  $region3: #{tile.8} parent=0 // pred_check_branch
    %3 = sbr.rel (0) target = $region5
  $region4: #{tile.8} parent=0 // pred_region
    _
  $region5: #{tile.8} parent=0 // pred_fallthru
    _
  %v4 = vld [vmem:[%s0] ss:$0 sm:$0xff]
  %5 = vst [vmem:[%s1] sm:$0xff] %v4

// kernel: tile.0
$region0: #{tile.0}
  %s0 = inlined_call_operand.vmem [shape: f32[8,8], index: 0, kind: input, shape index: {}]
  %s1 = inlined_call_operand.vmem [shape: f32[64,1], index: 1, kind: output, shape index: {}]
  %v2 = vld [vmem:[%s0] sm:$0xff]
  %vm3 = vcmask 7168
  %4 = vst.msk [vmem:[%s1] ss:$8 sm:$0xf] %vm3, %v2
  %5 = vst.msk [vmem:[%s1] ss:$8 sm:$0xf0] %vm3, %v2
  %v6 = vld [vmem:[%s0] sm:$0xff]
  %7 = vrot.lane.b32.xlu0 %v6, 127
  %v8 = vpop.permute.xlu0 %7
  %vm9 = vcmask 7168
  %s10 = scalar_lea.vmem %s1, 1
  %11 = vst.msk [vmem:[%s10] ss:$8 sm:$0xf] %vm9, %v8
  %s12 = scalar_lea.vmem %s1, 1
  %13 = vst.msk [vmem:[%s12] ss:$8 sm:$0xf0] %vm9, %v8
  %v14 = vld [vmem:[%s0] sm:$0xff]
  %15 = vrot.lane.b32.xlu0 %v14, 126
  %v16 = vpop.permute.xlu0 %15
  %vm17 = vcmask 7168
  %s18 = scalar_lea.vmem %s1, 2
  %19 = vst.msk [vmem:[%s18] ss:$8 sm:$0xf] %vm17, %v16
  %s20 = scalar_lea.vmem %s1, 2
  %21 = vst.msk [vmem:[%s20] ss:$8 sm:$0xf0] %vm17, %v16
  %v22 = vld [vmem:[%s0] sm:$0xff]
  %23 = vrot.lane.b32.xlu0 %v22, 125
  %v24 = vpop.permute.xlu0 %23
  %vm25 = vcmask 7168
  %s26 = scalar_lea.vmem %s1, 3
  %27 = vst.msk [vmem:[%s26] ss:$8 sm:$0xf] %vm25, %v24
  %s28 = scalar_lea.vmem %s1, 3
  %29 = vst.msk [vmem:[%s28] ss:$8 sm:$0xf0] %vm25, %v24
  %v30 = vld [vmem:[%s0] sm:$0xff]
  %31 = vrot.lane.b32.xlu0 %v30, 124
  %v32 = vpop.permute.xlu0 %31
  %vm33 = vcmask 7168
  %s34 = scalar_lea.vmem %s1, 4
  %35 = vst.msk [vmem:[%s34] ss:$8 sm:$0xf] %vm33, %v32
  %s36 = scalar_lea.vmem %s1, 4
  %37 = vst.msk [vmem:[%s36] ss:$8 sm:$0xf0] %vm33, %v32
  %v38 = vld [vmem:[%s0] sm:$0xff]
  %39 = vrot.lane.b32.xlu0 %v38, 123
  %v40 = vpop.permute.xlu0 %39
  %vm41 = vcmask 7168
  %s42 = scalar_lea.vmem %s1, 5
  %43 = vst.msk [vmem:[%s42] ss:$8 sm:$0xf] %vm41, %v40
  %s44 = scalar_lea.vmem %s1, 5
  %45 = vst.msk [vmem:[%s44] ss:$8 sm:$0xf0] %vm41, %v40
  %v46 = vld [vmem:[%s0] sm:$0xff]
  %47 = vrot.lane.b32.xlu0 %v46, 122
  %v48 = vpop.permute.xlu0 %47
  %vm49 = vcmask 7168
  %s50 = scalar_lea.vmem %s1, 6
  %51 = vst.msk [vmem:[%s50] ss:$8 sm:$0xf] %vm49, %v48
  %s52 = scalar_lea.vmem %s1, 6
  %53 = vst.msk [vmem:[%s52] ss:$8 sm:$0xf0] %vm49, %v48
  %v54 = vld [vmem:[%s0] sm:$0xff]
  %55 = vrot.lane.b32.xlu0 %v54, 121
  %v56 = vpop.permute.xlu0 %55
  %vm57 = vcmask 7168
  %s58 = scalar_lea.vmem %s1, 7
  %59 = vst.msk [vmem:[%s58] ss:$8 sm:$0xf] %vm57, %v56
  %s60 = scalar_lea.vmem %s1, 7
  %61 = vst.msk [vmem:[%s60] ss:$8 sm:$0xf0] %vm57, %v56

// kernel: spatial_fc.1
$region0: #{spatial_fc.1}
  #allocation0 [shape = 'u32[]', space=smem, size = 0x4, offset = 0x4, fixed_abs, tag = 'smem constant byte address 0x4 - core index']
  #allocation1 [shape = 'u32[144,128]{1,0:T(1,128)}', space=vmem, size = 0x12000, scoped, tag = 'internal scratch']
  %s0 = inlined_call_operand.vmem [shape: f32[1,64,128], index: 0, kind: input, shape index: {}]
  %s1 = inlined_call_operand.vmem [shape: f32[64,64], index: 1, kind: input, shape index: {}]
  %s2 = inlined_call_operand.vmem [shape: f32[64,1], index: 2, kind: input, shape index: {}]
  %s3 = inlined_call_operand.hbm [shape: f32[1,64,128], index: 3, kind: output, shape index: {}]
  %s4 = sld [smem:[#allocation0]]
  $region22: #{spatial_fc.1} parent=0
    _
  %s6 = ssub.s32 1, %s4
  %s7 = scalar_select 0, %s6, %s4
  $region1: #{spatial_fc.1} parent=0
    #allocation2 [shape = 'u8[32768]{0}', space=vmem, size = 0x8000, scoped, tag = 'output window, operand 0, single buffered']
    #allocation3 [shape = 's32[1]{0}', space=sflag, size = 0x4, scoped, tag = 'scoped memory for spatial_fc.1']
    %8 = vsyncpa [#allocation3], 0
    // Predicated region
    $region2: #{spatial_fc.1} parent=1 // pred_check
      _
    $region3: #{spatial_fc.1} parent=1 // pred_check_branch
      %10 = sbr.rel (0) target = $region5
    $region4: #{spatial_fc.1} parent=1 // pred_region
      _
    $region5: #{spatial_fc.1} parent=1 // pred_fallthru
      _
    // Predicated region
    $region6: #{spatial_fc.1} parent=1 // pred_check
      _
    $region7: #{spatial_fc.1} parent=1 // pred_check_branch
      %12 = sbr.rel (0) target = $region9
    $region8: #{spatial_fc.1} parent=1 // pred_region
      _
    $region9: #{spatial_fc.1} parent=1 // pred_fallthru
      _
    // Predicated region
    $region10: #{spatial_fc.1} parent=1 // pred_check
      _
    $region11: #{spatial_fc.1} parent=1 // pred_check_branch
      %14 = sbr.rel (0) target = $region13
    $region12: #{spatial_fc.1} parent=1 // pred_region
      _
    $region13: #{spatial_fc.1} parent=1 // pred_fallthru
      _
    %v15 = vld [vmem:[%s1] sm:$0xff]
    %v16 = vld [vmem:[%s1 + $0x8] sm:$0xff]
    %v17 = vld [vmem:[%s1 + $0x10] sm:$0xff]
    %v18 = vld [vmem:[%s1 + $0x18] sm:$0xff]
    %v19 = vld [vmem:[%s1 + $0x20] sm:$0xff]
    %v20 = vld [vmem:[%s1 + $0x28] sm:$0xff]
    %v21 = vld [vmem:[%s1 + $0x30] sm:$0xff]
    %v22 = vld [vmem:[%s1 + $0x38] sm:$0xff]
    %v23 = vld [vmem:[%s2] sm:$0xff]
    %v24 = vld [vmem:[%s2 + $0x8] sm:$0xff]
    %v25 = vld [vmem:[%s2 + $0x10] sm:$0xff]
    %v26 = vld [vmem:[%s2 + $0x18] sm:$0xff]
    %v27 = vld [vmem:[%s2 + $0x20] sm:$0xff]
    %v28 = vld [vmem:[%s2 + $0x28] sm:$0xff]
    %v29 = vld [vmem:[%s2 + $0x30] sm:$0xff]
    %v30 = vld [vmem:[%s2 + $0x38] sm:$0xff]
    %32 = vset.pattern.permute.xlu0 0
    %33 = vperm.xlu0 %32, %v23
    %v34 = vpop.permute.xlu0 %33
    %37 = vset.pattern.permute.xlu0 0
    %38 = vperm.xlu0 %37, %v24
    %v39 = vpop.permute.xlu0 %38
    %42 = vset.pattern.permute.xlu0 0
    %43 = vperm.xlu0 %42, %v25
    %v44 = vpop.permute.xlu0 %43
    %47 = vset.pattern.permute.xlu0 0
    %48 = vperm.xlu0 %47, %v26
    %v49 = vpop.permute.xlu0 %48
    %52 = vset.pattern.permute.xlu0 0
    %53 = vperm.xlu0 %52, %v27
    %v54 = vpop.permute.xlu0 %53
    %57 = vset.pattern.permute.xlu0 0
    %58 = vperm.xlu0 %57, %v28
    %v59 = vpop.permute.xlu0 %58
    %62 = vset.pattern.permute.xlu0 0
    %63 = vperm.xlu0 %62, %v29
    %v64 = vpop.permute.xlu0 %63
    %67 = vset.pattern.permute.xlu0 0
    %68 = vperm.xlu0 %67, %v30
    %v69 = vpop.permute.xlu0 %68
    %v71 = vld [vmem:[%s0] sm:$0xff]
    %v72 = vld [vmem:[%s0 + $0x8] sm:$0xff]
    %v73 = vld [vmem:[%s0 + $0x10] sm:$0xff]
    %v74 = vld [vmem:[%s0 + $0x18] sm:$0xff]
    %v75 = vld [vmem:[%s0 + $0x20] sm:$0xff]
    %v76 = vld [vmem:[%s0 + $0x28] sm:$0xff]
    %v77 = vld [vmem:[%s0 + $0x30] sm:$0xff]
    %v78 = vld [vmem:[%s0 + $0x38] sm:$0xff]
    %vm79 = vcmask 523264
    %v81 = vsel %vm79, %v15, 0
    %v84 = vsel %vm79, %v16, 0
    %v87 = vsel %vm79, %v17, 0
    %v90 = vsel %vm79, %v18, 0
    %v93 = vsel %vm79, %v19, 0
    %v96 = vsel %vm79, %v20, 0
    %v99 = vsel %vm79, %v21, 0
    %v102 = vsel %vm79, %v22, 0
    %104 = vmatprep.subr.mxu0 0.0
    %105 = vmatpush1.msra.mxu0 %v71
    %106 = vmatprep.subr.mxu0 0.0
    %107 = vmatpush1.msra.mxu0 %v72
    %108 = vmatprep.subr.mxu0 0.0
    %109 = vmatpush1.msra.mxu0 %v73
    %110 = vmatprep.subr.mxu0 0.0
    %111 = vmatpush1.msra.mxu0 %v74
    %112 = vmatprep.subr.mxu0 0.0
    %113 = vmatpush1.msra.mxu0 %v75
    %114 = vmatprep.subr.mxu0 0.0
    %115 = vmatpush1.msra.mxu0 %v76
    %116 = vmatprep.subr.mxu0 0.0
    %117 = vmatpush1.msra.mxu0 %v77
    %118 = vmatprep.subr.mxu0 0.0
    %119 = vmatpush1.msra.mxu0 %v78
    %120 = vmatprep.subr.mxu0 0.0
    %121 = vmatpush1.msra.mxu0 0.0
    %122 = vmatprep.subr.mxu0 0.0
    %123 = vmatpush1.msra.mxu0 0.0
    %124 = vmatprep.subr.mxu0 0.0
    %125 = vmatpush1.msra.mxu0 0.0
    %126 = vmatprep.subr.mxu0 0.0
    %127 = vmatpush1.msra.mxu0 0.0
    %128 = vmatprep.subr.mxu0 0.0
    %129 = vmatpush1.msra.mxu0 0.0
    %130 = vmatprep.subr.mxu0 0.0
    %131 = vmatpush1.msra.mxu0 0.0
    %132 = vmatprep.subr.mxu0 0.0
    %133 = vmatpush1.msra.mxu0 0.0
    %134 = vmatprep.subr.mxu0 0.0
    %135 = vmatpush1.msra.mxu0 0.0
    %136 = vmatprep.subr.mxu0 0.0
    %137 = vmatpush1.msra.mxu0 0.0
    %138 = vmatprep.subr.mxu0 0.0
    %139 = vmatpush1.msra.mxu0 0.0
    %140 = vmatprep.subr.mxu0 0.0
    %141 = vmatpush1.msra.mxu0 0.0
    %142 = vmatprep.subr.mxu0 0.0
    %143 = vmatpush1.msra.mxu0 0.0
    %144 = vmatprep.subr.mxu0 0.0
    %145 = vmatpush1.msra.mxu0 0.0
    %146 = vmatprep.subr.mxu0 0.0
    %147 = vmatpush1.msra.mxu0 0.0
    %148 = vmatprep.subr.mxu0 0.0
    %149 = vmatpush1.msra.mxu0 0.0
    %150 = vmatprep.subr.mxu0 0.0
    %151 = vmatpush1.msra.mxu0 0.0
    %152 = vmatprep.subr.mxu0 0.0
    %153 = vmatpush1.msra.mxu0 0.0
    %154 = vmatprep.subr.mxu0 0.0
    %155 = vmatpush1.msra.mxu0 0.0
    %156 = vmatprep.subr.mxu0 0.0
    %157 = vmatpush1.msra.mxu0 0.0
    %158 = vmatprep.subr.mxu0 0.0
    %159 = vmatpush1.msra.mxu0 0.0
    %160 = vmatprep.subr.mxu0 0.0
    %161 = vmatpush1.msra.mxu0 0.0
    %162 = vmatprep.subr.mxu0 0.0
    %163 = vmatpush1.msra.mxu0 0.0
    %164 = vmatprep.subr.mxu0 0.0
    %165 = vmatpush1.msra.mxu0 0.0
    %166 = vmatprep.subr.mxu0 0.0
    %167 = vmatpush1.msra.mxu0 0.0
    %168 = vmatprep.mubr.f32.mxu0 0.0
    %169 = vmatmul.mubr.f32.gmra.mrb[0].mxu0 %v81
    %v170 = vpop.f32.mrb[0].mxu0
    %v171 = vadd.f32 %v34, %v170
    %v172 = vpop.f32.mrb[0].mxu0
    %173 = vmatprep.mubr.f32.mxu0 0.0
    %174 = vmatmul.mubr.f32.gmra.mrb[0].mxu0 %v84
    %v175 = vpop.f32.mrb[0].mxu0
    %v176 = vadd.f32 %v39, %v175
    %v177 = vpop.f32.mrb[0].mxu0
    %178 = vmatprep.mubr.f32.mxu0 0.0
    %179 = vmatmul.mubr.f32.gmra.mrb[0].mxu0 %v87
    %v180 = vpop.f32.mrb[0].mxu0
    %v181 = vadd.f32 %v44, %v180
    %v182 = vpop.f32.mrb[0].mxu0
    %183 = vmatprep.mubr.f32.mxu0 0.0
    %184 = vmatmul.mubr.f32.gmra.mrb[0].mxu0 %v90
    %v185 = vpop.f32.mrb[0].mxu0
    %v186 = vadd.f32 %v49, %v185
    %v187 = vpop.f32.mrb[0].mxu0
    %188 = vmatprep.mubr.f32.mxu0 0.0
    %189 = vmatmul.mubr.f32.gmra.mrb[0].mxu0 %v93
    %v190 = vpop.f32.mrb[0].mxu0
    %v191 = vadd.f32 %v54, %v190
    %v192 = vpop.f32.mrb[0].mxu0
    %193 = vmatprep.mubr.f32.mxu0 0.0
    %194 = vmatmul.mubr.f32.gmra.mrb[0].mxu0 %v96
    %v195 = vpop.f32.mrb[0].mxu0
    %v196 = vadd.f32 %v59, %v195
    %v197 = vpop.f32.mrb[0].mxu0
    %198 = vmatprep.mubr.f32.mxu0 0.0
    %199 = vmatmul.mubr.f32.gmra.mrb[0].mxu0 %v99
    %v200 = vpop.f32.mrb[0].mxu0
    %v201 = vadd.f32 %v64, %v200
    %v202 = vpop.f32.mrb[0].mxu0
    %203 = vmatprep.mubr.f32.mxu0 0.0
    %204 = vmatmul.mubr.f32.gmra.mrb[0].mxu0 %v102
    %v205 = vpop.f32.mrb[0].mxu0
    %v206 = vadd.f32 %v69, %v205
    %v207 = vpop.f32.mrb[0].mxu0
    %208 = vdwg.mxu0
    %209 = vst [vmem:[#allocation2] sm:$0xff] %v171
    %210 = vst [vmem:[#allocation2 + $0x8] sm:$0xff] %v176
    %211 = vst [vmem:[#allocation2 + $0x10] sm:$0xff] %v181
    %212 = vst [vmem:[#allocation2 + $0x18] sm:$0xff] %v186
    %213 = vst [vmem:[#allocation2 + $0x20] sm:$0xff] %v191
    %214 = vst [vmem:[#allocation2 + $0x28] sm:$0xff] %v196
    %215 = vst [vmem:[#allocation2 + $0x30] sm:$0xff] %v201
    %216 = vst [vmem:[#allocation2 + $0x38] sm:$0xff] %v206
    // Predicated region
    $region14: #{spatial_fc.1} parent=1 // pred_check
      _
    $region15: #{spatial_fc.1} parent=1 // pred_check_branch
      %218 = sbr.rel (0) target = $region17
    $region16: #{spatial_fc.1} parent=1 // pred_region
      %s220 = ssub.s32 1024, 1024
      %221 = vsyncadd [#allocation3], %s220
      %s222 = sshll.u32 [#allocation2], 4
      %s223 = int_to_ptr.vmem [resolvable:$true] %s222
      %228 = dma.vmem_to_hbm [thread:$0]  %s223, 1024, %s3, [#allocation3], 128, 128, 8
    $region17: #{spatial_fc.1} parent=1 // pred_fallthru
      _
    // Predicated region
    $region18: #{spatial_fc.1} parent=1 // pred_check
      _
    $region19: #{spatial_fc.1} parent=1 // pred_check_branch
      %230 = sbr.rel (0) target = $region21
    $region20: #{spatial_fc.1} parent=1 // pred_region
      %231 = dma.done [#allocation3], 1024
    $region21: #{spatial_fc.1} parent=1 // pred_fallthru
      _
    %232 = vsyncpa [#allocation3], 1

</llo_original>
